<compile_context>
chip_gen: v7x
topology: tpu7x:2x2x1
jax: 0.10.0
libtpu: 0.0.40
codegen_flags: <defaults>
</compile_context>

<pallas_src>
import math

import jax
import jax.numpy as jnp
from jax.experimental import pallas as pl
from jax.experimental.pallas import tpu as pltpu


def _round_up(n, m):
    return ((n + m - 1) // m) * m


def _pad_to(a, shape):
    pads = [(0, s - d) for d, s in zip(a.shape, shape)]
    if any(p for _, p in pads):
        a = jnp.pad(a, pads)
    return a


def _ffn_gelu_kernel(x_ref, w1_ref, b1_ref, w2_ref, b2_ref, o_ref, acc_ref):
    # x_ref:  (tm, E)   bf16
    # w1_ref: (E, th)   bf16      b1_ref: (1, th) f32
    # w2_ref: (th, E)   bf16      b2_ref: (1, E)  f32
    # o_ref:  (tm, E)   f32       acc_ref: (tm, E) f32 scratch
    hi = pl.program_id(1)

    @pl.when(hi == 0)
    def _():
        acc_ref[...] = jnp.zeros_like(acc_ref)

    # First linear slab: (tm, E) @ (E, th) -> f32, plus bias slab.
    h = jnp.dot(x_ref[...], w1_ref[...], preferred_element_type=jnp.float32)
    h = h + b1_ref[...]

    # GELU tanh approximation in f32 (matches the PyTorch reference):
    # 0.5 * x * (1 + tanh(sqrt(2/pi) * (x + 0.044715 * x^3)))
    c = jnp.float32(math.sqrt(2.0 / math.pi))
    g = 0.5 * h * (1.0 + jnp.tanh(c * (h + jnp.float32(0.044715) * (h * h * h))))

    # Second linear: accumulate this hidden slab's (tm, E) partial product.
    acc_ref[...] += jnp.dot(g.astype(w2_ref.dtype), w2_ref[...],
                            preferred_element_type=jnp.float32)

    @pl.when(hi == pl.num_programs(1) - 1)
    def _():
        o_ref[...] = (acc_ref[...] + b2_ref[...]).astype(o_ref.dtype)


def feed_forward_gelu(x, w1, b1, w2, b2, *, tm=256, th=512):
    """x: (B, T, E) float32; w1: (E, H); b1: (H,); w2: (H, E); b2: (E,)."""
    B, T, E = x.shape
    H = w1.shape[1]
    M = B * T

    # Padded / tiled sizes: lane-dense last dims (multiples of 128), sublane
    # multiples of 8, and tiles that evenly divide the padded extents.
    E_pad = _round_up(E, 128)
    H_pad = _round_up(H, 128)
    th_eff = min(th, H_pad)
    H_pad = _round_up(H_pad, th_eff)

    M_pad = _round_up(M, 8)
    tm_eff = min(tm, M_pad)
    M_pad = _round_up(M_pad, tm_eff)

    # Wrapper-side casts / zero-padding (padded rows/cols contribute nothing
    # to the un-padded outputs, which we slice out at the end).
    x2d = _pad_to(x.reshape(M, E), (M_pad, E_pad)).astype(jnp.bfloat16)
    w1_p = _pad_to(w1, (E_pad, H_pad)).astype(jnp.bfloat16)
    w2_p = _pad_to(w2, (H_pad, E_pad)).astype(jnp.bfloat16)
    b1_p = _pad_to(b1.reshape(1, H), (1, H_pad)).astype(jnp.float32)
    b2_p = _pad_to(b2.reshape(1, E), (1, E_pad)).astype(jnp.float32)

    grid = (M_pad // tm_eff, H_pad // th_eff)

    cost = pl.CostEstimate(
        flops=4 * M_pad * E_pad * H_pad,            # two matmuls
        transcendentals=M_pad * H_pad,              # tanh per hidden element
        bytes_accessed=(x2d.size * 2 + w1_p.size * 2 + w2_p.size * 2
                        + b1_p.size * 4 + b2_p.size * 4 + M_pad * E_pad * 4),
    )

    out2d = pl.pallas_call(
        _ffn_gelu_kernel,
        out_shape=jax.ShapeDtypeStruct((M_pad, E_pad), jnp.float32),
        grid_spec=pltpu.PrefetchScalarGridSpec(
            num_scalar_prefetch=0,
            grid=grid,
            in_specs=[
                pl.BlockSpec((tm_eff, E_pad), lambda i, h: (i, 0)),  # x rows
                pl.BlockSpec((E_pad, th_eff), lambda i, h: (0, h)),  # W1 slab
                pl.BlockSpec((1, th_eff), lambda i, h: (0, h)),      # b1 slab
                pl.BlockSpec((th_eff, E_pad), lambda i, h: (h, 0)),  # W2 slab
                pl.BlockSpec((1, E_pad), lambda i, h: (0, 0)),       # b2
            ],
            out_specs=pl.BlockSpec((tm_eff, E_pad), lambda i, h: (i, 0)),
            scratch_shapes=[pltpu.VMEM((tm_eff, E_pad), jnp.float32)],
        ),
        compiler_params=pltpu.CompilerParams(
            dimension_semantics=("parallel", "arbitrary"),
            vmem_limit_bytes=64 * 1024 * 1024,
        ),
        cost_estimate=cost,
    )(x2d, w1_p, b1_p, w2_p, b2_p)

    return out2d[:M, :E].reshape(B, T, E).astype(x.dtype)


if __name__ == "__main__":
    # Small shapes consistent with the module: emb_dim=32 -> hidden=128.
    batch, seq, emb_dim = 2, 8, 32
    hidden = 4 * emb_dim

    key = jax.random.PRNGKey(0)
    kx, kw1, kb1, kw2, kb2 = jax.random.split(key, 5)

    x = jax.random.normal(kx, (batch, seq, emb_dim), dtype=jnp.float32)
    # PyTorch Linear weight is (out, in); we store the transposed (in, out)
    # layout so the kernel computes x @ W directly.
    w1 = jax.random.normal(kw1, (emb_dim, hidden), dtype=jnp.float32) * 0.02
    b1 = jax.random.normal(kb1, (hidden,), dtype=jnp.float32) * 0.02
    w2 = jax.random.normal(kw2, (hidden, emb_dim), dtype=jnp.float32) * 0.02
    b2 = jax.random.normal(kb2, (emb_dim,), dtype=jnp.float32) * 0.02

    out = feed_forward_gelu(x, w1, b1, w2, b2)
    out = jax.block_until_ready(out)

    # Pure-JAX f32 reference of the same math (kernel uses bf16 matmul inputs
    # with f32 accumulation, so compare with a bf16-appropriate tolerance).
    h_ref = x.reshape(-1, emb_dim) @ w1 + b1
    c = math.sqrt(2.0 / math.pi)
    g_ref = 0.5 * h_ref * (1.0 + jnp.tanh(c * (h_ref + 0.044715 * h_ref ** 3)))
    y_ref = (g_ref @ w2 + b2).reshape(batch, seq, emb_dim)

    assert out.shape == y_ref.shape
    assert jnp.allclose(out, y_ref, atol=5e-3, rtol=2e-2), "mismatch vs reference"

    print("KERNEL_OK")
</pallas_src>

<mosaic_0001>
module attributes {stable_mosaic.version = 11 : i64} {
  func.func @_ffn_gelu_kernel(%arg0: i32, %arg1: i32, %arg2: memref<16x128xbf16, #tpu.memory_space<vmem>>, %arg3: memref<128x128xbf16, #tpu.memory_space<vmem>>, %arg4: memref<1x128xf32, #tpu.memory_space<vmem>>, %arg5: memref<128x128xbf16, #tpu.memory_space<vmem>>, %arg6: memref<1x128xf32, #tpu.memory_space<vmem>>, %arg7: memref<16x128xf32, #tpu.memory_space<vmem>>, %arg8: memref<16x128xf32, #tpu.memory_space<vmem>>) attributes {dimension_semantics = [#tpu.dimension_semantics<parallel>, #tpu.dimension_semantics<arbitrary>], iteration_bounds = array<i64: 1, 1>, scalar_prefetch = 0 : i64, scratch_operands = 1 : i64, tpu.core_type = #tpu.core_type<tc>, window_params = [{transform_indices = @transform_0, window_bounds = array<i64: 16, 128>}, {transform_indices = @transform_1, window_bounds = array<i64: 128, 128>}, {transform_indices = @transform_2, window_bounds = array<i64: 1, 128>}, {transform_indices = @transform_3, window_bounds = array<i64: 128, 128>}, {pipeline_mode = #tpu.pipeline_mode<synchronous>, transform_indices = @transform_4, window_bounds = array<i64: 1, 128>}, {transform_indices = @transform_5, window_bounds = array<i64: 16, 128>}]} {
    %c0_i32 = arith.constant 0 : i32
    %0 = arith.cmpi eq, %arg1, %c0_i32 : i32
    %1 = arith.extui %0 : i1 to i32
    %c0_i32_0 = arith.constant 0 : i32
    %2 = arith.cmpi ne, %1, %c0_i32_0 : i32
    scf.if %2 {
      %cst_19 = arith.constant 0.000000e+00 : f32
      %31 = vector.broadcast %cst_19 : f32 to vector<16x128xf32>
      %c0_20 = arith.constant 0 : index
      %c0_21 = arith.constant 0 : index
      %32 = vector.load %arg8[%c0_20, %c0_21] : memref<16x128xf32, #tpu.memory_space<vmem>>, vector<16x128xf32>
      tpu.vector_store %arg8[%c0_20, %c0_21], %31 {strides = array<i32>} : memref<16x128xf32, #tpu.memory_space<vmem>>, vector<16x128xf32>,
    } else {
    }
    %c0 = arith.constant 0 : index
    %c0_1 = arith.constant 0 : index
    %3 = vector.load %arg2[%c0, %c0_1] : memref<16x128xbf16, #tpu.memory_space<vmem>>, vector<16x128xbf16>
    %c0_2 = arith.constant 0 : index
    %c0_3 = arith.constant 0 : index
    %4 = vector.load %arg3[%c0_2, %c0_3] : memref<128x128xbf16, #tpu.memory_space<vmem>>, vector<128x128xbf16>
    %cst = arith.constant dense<0.000000e+00> : vector<16x128xf32>
    %5 = tpu.matmul %3, %4, %cst {dimension_numbers = #tpu.dot_dimension_numbers<[1], [0], [0], [1], [0, 0, 1, 1], [], []>} : vector<16x128xbf16>, vector<128x128xbf16>, vector<16x128xf32> -> vector<16x128xf32>
    %c0_4 = arith.constant 0 : index
    %c0_5 = arith.constant 0 : index
    %6 = vector.load %arg4[%c0_4, %c0_5] : memref<1x128xf32, #tpu.memory_space<vmem>>, vector<1x128xf32>
    %7 = vector.broadcast %6 : vector<1x128xf32> to vector<16x128xf32>
    %8 = arith.addf %5, %7 : vector<16x128xf32>
    %cst_6 = arith.constant 5.000000e-01 : f32
    %9 = vector.broadcast %cst_6 : f32 to vector<16x128xf32>
    %10 = arith.mulf %9, %8 : vector<16x128xf32>
    %11 = arith.mulf %8, %8 : vector<16x128xf32>
    %12 = arith.mulf %11, %8 : vector<16x128xf32>
    %cst_7 = arith.constant 4.471500e-02 : f32
    %13 = vector.broadcast %cst_7 : f32 to vector<16x128xf32>
    %14 = arith.mulf %13, %12 : vector<16x128xf32>
    %15 = arith.addf %8, %14 : vector<16x128xf32>
    %cst_8 = arith.constant 0.797884583 : f32
    %16 = vector.broadcast %cst_8 : f32 to vector<16x128xf32>
    %17 = arith.mulf %16, %15 : vector<16x128xf32>
    %18 = math.tanh %17 : vector<16x128xf32>
    %cst_9 = arith.constant 1.000000e+00 : f32
    %19 = vector.broadcast %cst_9 : f32 to vector<16x128xf32>
    %20 = arith.addf %19, %18 : vector<16x128xf32>
    %21 = arith.mulf %10, %20 : vector<16x128xf32>
    %c0_10 = arith.constant 0 : index
    %c0_11 = arith.constant 0 : index
    %22 = vector.load %arg8[%c0_10, %c0_11] : memref<16x128xf32, #tpu.memory_space<vmem>>, vector<16x128xf32>
    %23 = arith.truncf %21 : vector<16x128xf32> to vector<16x128xbf16>
    %c0_12 = arith.constant 0 : index
    %c0_13 = arith.constant 0 : index
    %24 = vector.load %arg5[%c0_12, %c0_13] : memref<128x128xbf16, #tpu.memory_space<vmem>>, vector<128x128xbf16>
    %cst_14 = arith.constant dense<0.000000e+00> : vector<16x128xf32>
    %25 = tpu.matmul %23, %24, %cst_14 {dimension_numbers = #tpu.dot_dimension_numbers<[1], [0], [0], [1], [0, 0, 1, 1], [], []>} : vector<16x128xbf16>, vector<128x128xbf16>, vector<16x128xf32> -> vector<16x128xf32>
    %26 = arith.addf %22, %25 : vector<16x128xf32>
    %c0_15 = arith.constant 0 : index
    %c0_16 = arith.constant 0 : index
    %27 = vector.load %arg8[%c0_15, %c0_16] : memref<16x128xf32, #tpu.memory_space<vmem>>, vector<16x128xf32>
    tpu.vector_store %arg8[%c0_15, %c0_16], %26 {strides = array<i32>} : memref<16x128xf32, #tpu.memory_space<vmem>>, vector<16x128xf32>,
    %c0_i32_17 = arith.constant 0 : i32
    %28 = arith.cmpi eq, %arg1, %c0_i32_17 : i32
    %29 = arith.extui %28 : i1 to i32
    %c0_i32_18 = arith.constant 0 : i32
    %30 = arith.cmpi ne, %29, %c0_i32_18 : i32
    scf.if %30 {
      %c0_19 = arith.constant 0 : index
      %c0_20 = arith.constant 0 : index
      %31 = vector.load %arg8[%c0_19, %c0_20] : memref<16x128xf32, #tpu.memory_space<vmem>>, vector<16x128xf32>
      %c0_21 = arith.constant 0 : index
      %c0_22 = arith.constant 0 : index
      %32 = vector.load %arg6[%c0_21, %c0_22] : memref<1x128xf32, #tpu.memory_space<vmem>>, vector<1x128xf32>
      %33 = vector.broadcast %32 : vector<1x128xf32> to vector<16x128xf32>
      %34 = arith.addf %31, %33 : vector<16x128xf32>
      %c0_23 = arith.constant 0 : index
      %c0_24 = arith.constant 0 : index
      %35 = vector.load %arg7[%c0_23, %c0_24] : memref<16x128xf32, #tpu.memory_space<vmem>>, vector<16x128xf32>
      tpu.vector_store %arg7[%c0_23, %c0_24], %34 {strides = array<i32>} : memref<16x128xf32, #tpu.memory_space<vmem>>, vector<16x128xf32>,
    } else {
    }
    return
  }
  func.func @transform_0(%arg0: i32, %arg1: i32) -> (i32, i32) {
    %c0_i32 = arith.constant 0 : i32
    %c0_i32_0 = arith.constant 0 : i32
    return %arg0, %c0_i32 : i32, i32
  }
  func.func @transform_1(%arg0: i32, %arg1: i32) -> (i32, i32) {
    %c0_i32 = arith.constant 0 : i32
    %c0_i32_0 = arith.constant 0 : i32
    return %c0_i32, %arg1 : i32, i32
  }
  func.func @transform_2(%arg0: i32, %arg1: i32) -> (i32, i32) {
    %c0_i32 = arith.constant 0 : i32
    %c0_i32_0 = arith.constant 0 : i32
    return %c0_i32, %arg1 : i32, i32
  }
  func.func @transform_3(%arg0: i32, %arg1: i32) -> (i32, i32) {
    %c0_i32 = arith.constant 0 : i32
    %c0_i32_0 = arith.constant 0 : i32
    return %arg1, %c0_i32 : i32, i32
  }
  func.func @transform_4(%arg0: i32, %arg1: i32) -> (i32, i32) {
    %c0_i32 = arith.constant 0 : i32
    %c0_i32_0 = arith.constant 0 : i32
    %c0_i32_1 = arith.constant 0 : i32
    return %c0_i32, %c0_i32_0 : i32, i32
  }
  func.func @transform_5(%arg0: i32, %arg1: i32) -> (i32, i32) {
    %c0_i32 = arith.constant 0 : i32
    %c0_i32_0 = arith.constant 0 : i32
    return %arg0, %c0_i32 : i32, i32
  }
}

</mosaic_0001>

<llo_original>
// kernel: tpu_custom_call.1
$region0: #{tpu_custom_call.1}
  #allocation0 [shape = 'u32[]', space=smem, size = 0x4, offset = 0x4, fixed_abs, tag = 'smem constant byte address 0x4 - core index']
  #allocation1 [shape = 'u32[144,128]{1,0:T(1,128)}', space=vmem, size = 0x12000, scoped, tag = 'internal scratch']
  #allocation2 [shape = 'f32[16,128]{1,0:T(8,128)}', space=vmem, size = 0x2000, scoped, tag = 'scratch operand']
  %s0 = inlined_call_operand.hbm [shape: bf16[16,128], index: 0, kind: input, shape index: {}]
  %s1 = inlined_call_operand.hbm [shape: bf16[128,128], index: 1, kind: input, shape index: {}]
  %s2 = inlined_call_operand.hbm [shape: f32[1,128], index: 2, kind: input, shape index: {}]
  %s3 = inlined_call_operand.hbm [shape: bf16[128,128], index: 3, kind: input, shape index: {}]
  %s4 = inlined_call_operand.hbm [shape: f32[1,128], index: 4, kind: input, shape index: {}]
  %s5 = inlined_call_operand.hbm [shape: f32[16,128], index: 5, kind: output, shape index: {}]
  %s6 = sld [smem:[#allocation0]]
  $region58: #{tpu_custom_call.1} parent=0
    _
  %s8 = ssub.s32 1, %s6
  %s9 = scalar_select 0, %s8, %s6
  $region1: #{tpu_custom_call.1} parent=0
    #allocation3 [shape = 'u8[4096]{0}', space=vmem, size = 0x1000, scoped, tag = 'input window, operand 0, single buffered']
    #allocation4 [shape = 's32[1]{0}', space=sflag, size = 0x4, scoped, tag = 'scoped memory for tpu_custom_call.1']
    #allocation5 [shape = 's32[1]{0}', space=sflag, size = 0x4, scoped, tag = 'scoped memory for tpu_custom_call.1']
    #allocation6 [shape = 'u8[32768]{0}', space=vmem, size = 0x8000, scoped, tag = 'input window, operand 1, single buffered']
    #allocation7 [shape = 's32[1]{0}', space=sflag, size = 0x4, scoped, tag = 'scoped memory for tpu_custom_call.1']
    #allocation8 [shape = 'u8[512]{0}', space=vmem, size = 0x400, scoped, tag = 'input window, operand 2, single buffered']
    #allocation9 [shape = 'u8[32768]{0}', space=vmem, size = 0x8000, scoped, tag = 'input window, operand 3, single buffered']
    #allocation10 [shape = 's32[1]{0}', space=sflag, size = 0x4, scoped, tag = 'scoped memory for tpu_custom_call.1']
    #allocation11 [shape = 'u8[512]{0}', space=vmem, size = 0x400, scoped, tag = 'input window, operand 4, single buffered']
    #allocation12 [shape = 'u8[8192]{0}', space=vmem, size = 0x2000, scoped, tag = 'output window, operand 0, single buffered']
    %10 = vsyncpa [#allocation4], 0
    %11 = vsyncpa [#allocation7], 0
    %12 = vsyncpa [#allocation10], 0
    %13 = vsyncpa [#allocation5], 0
    // Predicated region
    $region2: #{tpu_custom_call.1} parent=1 // pred_check
      _
    $region3: #{tpu_custom_call.1} parent=1 // pred_check_branch
      %15 = sbr.rel (0) target = $region5
    $region4: #{tpu_custom_call.1} parent=1 // pred_region
      %s17 = ssub.s32 128, 128
      %18 = vsyncadd [#allocation4], %s17
      %s19 = sshll.u32 [#allocation3], 4
      %s20 = int_to_ptr.vmem [resolvable:$true] %s19
      %25 = dma.hbm_to_vmem [thread:$0]  %s0, 128, %s20, [#allocation4], 64, 64, 4
    $region5: #{tpu_custom_call.1} parent=1 // pred_fallthru
      _
    // Predicated region
    $region6: #{tpu_custom_call.1} parent=1 // pred_check
      _
    $region7: #{tpu_custom_call.1} parent=1 // pred_check_branch
      %27 = sbr.rel (0) target = $region9
    $region8: #{tpu_custom_call.1} parent=1 // pred_region
      %s29 = ssub.s32 1024, 1024
      %30 = vsyncadd [#allocation7], %s29
      %s31 = sshll.u32 [#allocation6], 4
      %s32 = int_to_ptr.vmem [resolvable:$true] %s31
      %37 = dma.hbm_to_vmem [thread:$0]  %s1, 1024, %s32, [#allocation7], 64, 64, 4
    $region9: #{tpu_custom_call.1} parent=1 // pred_fallthru
      _
    // Predicated region
    $region10: #{tpu_custom_call.1} parent=1 // pred_check
      _
    $region11: #{tpu_custom_call.1} parent=1 // pred_check_branch
      %39 = sbr.rel (0) target = $region13
    $region12: #{tpu_custom_call.1} parent=1 // pred_region
      %s41 = ssub.s32 16, 16
      %42 = vsyncadd [#allocation7], %s41
      %s44 = sshll.u32 [#allocation8], 4
      %s45 = int_to_ptr.vmem [resolvable:$true] %s44
      %47 = dma.hbm_to_vmem [thread:$0]  %s2, 16, %s45, [#allocation7]
    $region13: #{tpu_custom_call.1} parent=1 // pred_fallthru
      _
    // Predicated region
    $region14: #{tpu_custom_call.1} parent=1 // pred_check
      _
    $region15: #{tpu_custom_call.1} parent=1 // pred_check_branch
      %49 = sbr.rel (0) target = $region17
    $region16: #{tpu_custom_call.1} parent=1 // pred_region
      %s51 = ssub.s32 1024, 1024
      %52 = vsyncadd [#allocation10], %s51
      %s53 = sshll.u32 [#allocation9], 4
      %s54 = int_to_ptr.vmem [resolvable:$true] %s53
      %59 = dma.hbm_to_vmem [thread:$0]  %s3, 1024, %s54, [#allocation10], 64, 64, 4
    $region17: #{tpu_custom_call.1} parent=1 // pred_fallthru
      _
    // Predicated region
    $region18: #{tpu_custom_call.1} parent=1 // pred_check
      _
    $region19: #{tpu_custom_call.1} parent=1 // pred_check_branch
      %61 = sbr.rel (0) target = $region21
    $region20: #{tpu_custom_call.1} parent=1 // pred_region
      %s63 = ssub.s32 16, 16
      %64 = vsyncadd [#allocation10], %s63
      %s66 = sshll.u32 [#allocation11], 4
      %s67 = int_to_ptr.vmem [resolvable:$true] %s66
      %69 = dma.hbm_to_vmem [thread:$0]  %s4, 16, %s67, [#allocation10]
    $region21: #{tpu_custom_call.1} parent=1 // pred_fallthru
      _
    // Predicated region
    $region22: #{tpu_custom_call.1} parent=1 // pred_check
      _
    $region23: #{tpu_custom_call.1} parent=1 // pred_check_branch
      %71 = sbr.rel (0) target = $region25
    $region24: #{tpu_custom_call.1} parent=1 // pred_region
      %72 = dma.done [#allocation4], 128
    $region25: #{tpu_custom_call.1} parent=1 // pred_fallthru
      _
    // Predicated region
    $region26: #{tpu_custom_call.1} parent=1 // pred_check
      _
    $region27: #{tpu_custom_call.1} parent=1 // pred_check_branch
      %74 = sbr.rel (0) target = $region29
    $region28: #{tpu_custom_call.1} parent=1 // pred_region
      %75 = dma.done [#allocation7], 1024
    $region29: #{tpu_custom_call.1} parent=1 // pred_fallthru
      _
    // Predicated region
    $region30: #{tpu_custom_call.1} parent=1 // pred_check
      _
    $region31: #{tpu_custom_call.1} parent=1 // pred_check_branch
      %77 = sbr.rel (0) target = $region33
    $region32: #{tpu_custom_call.1} parent=1 // pred_region
      %78 = dma.done [#allocation7], 16
    $region33: #{tpu_custom_call.1} parent=1 // pred_fallthru
      _
    // Predicated region
    $region34: #{tpu_custom_call.1} parent=1 // pred_check
      _
    $region35: #{tpu_custom_call.1} parent=1 // pred_check_branch
      %80 = sbr.rel (0) target = $region37
    $region36: #{tpu_custom_call.1} parent=1 // pred_region
      %81 = dma.done [#allocation10], 1024
    $region37: #{tpu_custom_call.1} parent=1 // pred_fallthru
      _
    // Predicated region
    $region38: #{tpu_custom_call.1} parent=1 // pred_check
      _
    $region39: #{tpu_custom_call.1} parent=1 // pred_check_branch
      %83 = sbr.rel (0) target = $region41
    $region40: #{tpu_custom_call.1} parent=1 // pred_region
      %84 = dma.done [#allocation10], 16
    $region41: #{tpu_custom_call.1} parent=1 // pred_fallthru
      _
    %p86 = scmp.eq.s32.totalorder 0, 0
    // Predicated region
    $region42: #{tpu_custom_call.1} parent=1 // pred_check
      %p87 = pneg %p86
    $region43: #{tpu_custom_call.1} parent=1 // pred_check_branch
      %89 = sbr.rel (%p87) target = $region45
    $region44: #{tpu_custom_call.1} parent=1 // pred_region
      %90 = vst [vmem:[#allocation2] sm:$0xff] 0.0
      %91 = vst [vmem:[#allocation2 + $0x8] sm:$0xff] 0.0
    $region45: #{tpu_custom_call.1} parent=1 // pred_fallthru
      _
    %v92 = vld [vmem:[#allocation3] sm:$0xf]
    %v93 = vld [vmem:[#allocation3 + $0x4] sm:$0xf]
    %v94 = vld [vmem:[#allocation6] sm:$0xf]
    %v95 = vld [vmem:[#allocation6 + $0x4] sm:$0xf]
    %v96 = vld [vmem:[#allocation6 + $0x8] sm:$0xf]
    %v97 = vld [vmem:[#allocation6 + $0xc] sm:$0xf]
    %v98 = vld [vmem:[#allocation6 + $0x10] sm:$0xf]
    %v99 = vld [vmem:[#allocation6 + $0x14] sm:$0xf]
    %v100 = vld [vmem:[#allocation6 + $0x18] sm:$0xf]
    %v101 = vld [vmem:[#allocation6 + $0x1c] sm:$0xf]
    %v102 = vld [vmem:[#allocation6 + $0x20] sm:$0xf]
    %v103 = vld [vmem:[#allocation6 + $0x24] sm:$0xf]
    %v104 = vld [vmem:[#allocation6 + $0x28] sm:$0xf]
    %v105 = vld [vmem:[#allocation6 + $0x2c] sm:$0xf]
    %v106 = vld [vmem:[#allocation6 + $0x30] sm:$0xf]
    %v107 = vld [vmem:[#allocation6 + $0x34] sm:$0xf]
    %v108 = vld [vmem:[#allocation6 + $0x38] sm:$0xf]
    %v109 = vld [vmem:[#allocation6 + $0x3c] sm:$0xf]
    %v110 = vld [vmem:[#allocation8] sm:$0x1]
    %v112 = vlaneseq
    %v113 = vshrl.u32 %v112, 7
    %v114 = vsub.s32 0, %v113
    %v115 = vrot.slane %v110, %v114
    %v119 = vunpack.c.l.b16 %v92
    %v120 = vunpack.c.l.b16 %v93
    %v121 = vpack.c.b16 %v120, %v119
    %v139 = vunpack.c.l.b16 %v94
    %v140 = vunpack.c.l.b16 %v95
    %v141 = vunpack.c.l.b16 %v96
    %v142 = vunpack.c.l.b16 %v97
    %v143 = vunpack.c.l.b16 %v98
    %v144 = vunpack.c.l.b16 %v99
    %v145 = vunpack.c.l.b16 %v100
    %v146 = vunpack.c.l.b16 %v101
    %v147 = vunpack.c.l.b16 %v102
    %v148 = vunpack.c.l.b16 %v103
    %v149 = vunpack.c.l.b16 %v104
    %v150 = vunpack.c.l.b16 %v105
    %v151 = vunpack.c.l.b16 %v106
    %v152 = vunpack.c.l.b16 %v107
    %v153 = vunpack.c.l.b16 %v108
    %v154 = vunpack.c.l.b16 %v109
    %v155 = vpack.c.b16 %v140, %v139
    %v156 = vpack.c.b16 %v142, %v141
    %v157 = vpack.c.b16 %v144, %v143
    %v158 = vpack.c.b16 %v146, %v145
    %v159 = vpack.c.b16 %v148, %v147
    %v160 = vpack.c.b16 %v150, %v149
    %v161 = vpack.c.b16 %v152, %v151
    %v162 = vpack.c.b16 %v154, %v153
    %171 = vmatprep.subr.bf16.mxu0 0
    %172 = vmatpush1.bf16.msra.mxu0 %v155
    %173 = vmatprep.subr.bf16.mxu0 0
    %174 = vmatpush1.bf16.msra.mxu0 %v156
    %175 = vmatprep.subr.bf16.mxu0 0
    %176 = vmatpush1.bf16.msra.mxu0 %v157
    %177 = vmatprep.subr.bf16.mxu0 0
    %178 = vmatpush1.bf16.msra.mxu0 %v158
    %179 = vmatprep.subr.bf16.mxu0 0
    %180 = vmatpush1.bf16.msra.mxu0 %v159
    %181 = vmatprep.subr.bf16.mxu0 0
    %182 = vmatpush1.bf16.msra.mxu0 %v160
    %183 = vmatprep.subr.bf16.mxu0 0
    %184 = vmatpush1.bf16.msra.mxu0 %v161
    %185 = vmatprep.subr.bf16.mxu0 0
    %186 = vmatpush1.bf16.msra.mxu0 %v162
    %187 = vmatprep.subr.bf16.mxu0 0
    %188 = vmatpush1.bf16.msra.mxu0 0
    %189 = vmatprep.subr.bf16.mxu0 0
    %190 = vmatpush1.bf16.msra.mxu0 0
    %191 = vmatprep.subr.bf16.mxu0 0
    %192 = vmatpush1.bf16.msra.mxu0 0
    %193 = vmatprep.subr.bf16.mxu0 0
    %194 = vmatpush1.bf16.msra.mxu0 0
    %195 = vmatprep.subr.bf16.mxu0 0
    %196 = vmatpush1.bf16.msra.mxu0 0
    %197 = vmatprep.subr.bf16.mxu0 0
    %198 = vmatpush1.bf16.msra.mxu0 0
    %199 = vmatprep.subr.bf16.mxu0 0
    %200 = vmatpush1.bf16.msra.mxu0 0
    %201 = vmatprep.subr.bf16.mxu0 0
    %202 = vmatpush1.bf16.msra.mxu0 0
    %203 = vmatprep.mubr.bf16.mxu0 0
    %204 = vmatmul.mubr.bf16.gmra.mrb[0].mxu0 %v121
    %v205 = vpop.f32.mrb[0].mxu0
    %v206 = vadd.f32 %v115, %v205
    %v207 = vpop.f32.mrb[0].mxu0
    %v208 = vpop.f32.mrb[0].mxu0
    %v209 = vadd.f32 %v115, %v208
    %v210 = vpop.f32.mrb[0].mxu0
    %211 = vdwg.mxu0
    %v212 = vmul.f32 %v206, 0.5
    %v213 = vmul.f32 %v209, 0.5
    %v214 = vmul.f32 %v206, %v206
    %v215 = vmul.f32 %v209, %v209
    %v216 = vmul.f32 %v214, %v206
    %v217 = vmul.f32 %v215, %v209
    %v218 = vmul.f32 %v216, 0.044715
    %v219 = vmul.f32 %v217, 0.044715
    %v220 = vadd.f32 %v206, %v218
    %v221 = vadd.f32 %v209, %v219
    %v222 = vmul.f32 %v220, 0.7978846
    %v223 = vmul.f32 %v221, 0.7978846
    %v224 = vtanh.pop %v222
    %v225 = vtanh.pop %v223
    %v226 = vadd.f32 %v224, 1.0
    %v227 = vadd.f32 %v225, 1.0
    %v228 = vmul.f32 %v212, %v226
    %v229 = vmul.f32 %v213, %v227
    %v230 = vld [vmem:[#allocation2] sm:$0xff]
    %v231 = vld [vmem:[#allocation2 + $0x8] sm:$0xff]
    %v232 = vpack.c.bf16 %v229, %v228
    %v233 = vld [vmem:[#allocation9] sm:$0xf]
    %v234 = vld [vmem:[#allocation9 + $0x4] sm:$0xf]
    %v235 = vld [vmem:[#allocation9 + $0x8] sm:$0xf]
    %v236 = vld [vmem:[#allocation9 + $0xc] sm:$0xf]
    %v237 = vld [vmem:[#allocation9 + $0x10] sm:$0xf]
    %v238 = vld [vmem:[#allocation9 + $0x14] sm:$0xf]
    %v239 = vld [vmem:[#allocation9 + $0x18] sm:$0xf]
    %v240 = vld [vmem:[#allocation9 + $0x1c] sm:$0xf]
    %v241 = vld [vmem:[#allocation9 + $0x20] sm:$0xf]
    %v242 = vld [vmem:[#allocation9 + $0x24] sm:$0xf]
    %v243 = vld [vmem:[#allocation9 + $0x28] sm:$0xf]
    %v244 = vld [vmem:[#allocation9 + $0x2c] sm:$0xf]
    %v245 = vld [vmem:[#allocation9 + $0x30] sm:$0xf]
    %v246 = vld [vmem:[#allocation9 + $0x34] sm:$0xf]
    %v247 = vld [vmem:[#allocation9 + $0x38] sm:$0xf]
    %v248 = vld [vmem:[#allocation9 + $0x3c] sm:$0xf]
    %v265 = vunpack.c.l.b16 %v233
    %v266 = vunpack.c.l.b16 %v234
    %v267 = vunpack.c.l.b16 %v235
    %v268 = vunpack.c.l.b16 %v236
    %v269 = vunpack.c.l.b16 %v237
    %v270 = vunpack.c.l.b16 %v238
    %v271 = vunpack.c.l.b16 %v239
    %v272 = vunpack.c.l.b16 %v240
    %v273 = vunpack.c.l.b16 %v241
    %v274 = vunpack.c.l.b16 %v242
    %v275 = vunpack.c.l.b16 %v243
    %v276 = vunpack.c.l.b16 %v244
    %v277 = vunpack.c.l.b16 %v245
    %v278 = vunpack.c.l.b16 %v246
    %v279 = vunpack.c.l.b16 %v247
    %v280 = vunpack.c.l.b16 %v248
    %v281 = vpack.c.b16 %v266, %v265
    %v282 = vpack.c.b16 %v268, %v267
    %v283 = vpack.c.b16 %v270, %v269
    %v284 = vpack.c.b16 %v272, %v271
    %v285 = vpack.c.b16 %v274, %v273
    %v286 = vpack.c.b16 %v276, %v275
    %v287 = vpack.c.b16 %v278, %v277
    %v288 = vpack.c.b16 %v280, %v279
    %297 = vmatprep.subr.bf16.mxu0 0
    %298 = vmatpush1.bf16.msra.mxu0 %v281
    %299 = vmatprep.subr.bf16.mxu0 0
    %300 = vmatpush1.bf16.msra.mxu0 %v282
    %301 = vmatprep.subr.bf16.mxu0 0
    %302 = vmatpush1.bf16.msra.mxu0 %v283
    %303 = vmatprep.subr.bf16.mxu0 0
    %304 = vmatpush1.bf16.msra.mxu0 %v284
    %305 = vmatprep.subr.bf16.mxu0 0
    %306 = vmatpush1.bf16.msra.mxu0 %v285
    %307 = vmatprep.subr.bf16.mxu0 0
    %308 = vmatpush1.bf16.msra.mxu0 %v286
    %309 = vmatprep.subr.bf16.mxu0 0
    %310 = vmatpush1.bf16.msra.mxu0 %v287
    %311 = vmatprep.subr.bf16.mxu0 0
    %312 = vmatpush1.bf16.msra.mxu0 %v288
    %313 = vmatprep.subr.bf16.mxu0 0
    %314 = vmatpush1.bf16.msra.mxu0 0
    %315 = vmatprep.subr.bf16.mxu0 0
    %316 = vmatpush1.bf16.msra.mxu0 0
    %317 = vmatprep.subr.bf16.mxu0 0
    %318 = vmatpush1.bf16.msra.mxu0 0
    %319 = vmatprep.subr.bf16.mxu0 0
    %320 = vmatpush1.bf16.msra.mxu0 0
    %321 = vmatprep.subr.bf16.mxu0 0
    %322 = vmatpush1.bf16.msra.mxu0 0
    %323 = vmatprep.subr.bf16.mxu0 0
    %324 = vmatpush1.bf16.msra.mxu0 0
    %325 = vmatprep.subr.bf16.mxu0 0
    %326 = vmatpush1.bf16.msra.mxu0 0
    %327 = vmatprep.subr.bf16.mxu0 0
    %328 = vmatpush1.bf16.msra.mxu0 0
    %329 = vmatprep.mubr.bf16.mxu0 0
    %330 = vmatmul.mubr.bf16.gmra.mrb[0].mxu0 %v232
    %v331 = vpop.f32.mrb[0].mxu0
    %v332 = vadd.f32 0.0, %v331
    %v333 = vpop.f32.mrb[0].mxu0
    %v334 = vpop.f32.mrb[0].mxu0
    %v335 = vadd.f32 0.0, %v334
    %v336 = vpop.f32.mrb[0].mxu0
    %337 = vdwg.mxu0
    %v338 = vadd.f32 %v230, %v332
    %v339 = vadd.f32 %v231, %v335
    %340 = vst [vmem:[#allocation2] sm:$0xff] %v338
    %341 = vst [vmem:[#allocation2 + $0x8] sm:$0xff] %v339
    // Predicated region
    $region46: #{tpu_custom_call.1} parent=1 // pred_check
      %p342 = pneg %p86
    $region47: #{tpu_custom_call.1} parent=1 // pred_check_branch
      %344 = sbr.rel (%p342) target = $region49
    $region48: #{tpu_custom_call.1} parent=1 // pred_region
      %v345 = vld [vmem:[#allocation2] sm:$0xff]
      %v346 = vld [vmem:[#allocation2 + $0x8] sm:$0xff]
      %v347 = vld [vmem:[#allocation11] sm:$0x1]
      %v349 = vlaneseq
      %v350 = vshrl.u32 %v349, 7
      %v351 = vsub.s32 0, %v350
      %v352 = vrot.slane %v347, %v351
      %v354 = vadd.f32 %v345, %v352
      %v355 = vadd.f32 %v346, %v352
      %356 = vst [vmem:[#allocation12] sm:$0xff] %v354
      %357 = vst [vmem:[#allocation12 + $0x8] sm:$0xff] %v355
    $region49: #{tpu_custom_call.1} parent=1 // pred_fallthru
      _
    // Predicated region
    $region50: #{tpu_custom_call.1} parent=1 // pred_check
      _
    $region51: #{tpu_custom_call.1} parent=1 // pred_check_branch
      %359 = sbr.rel (0) target = $region53
    $region52: #{tpu_custom_call.1} parent=1 // pred_region
      %s361 = ssub.s32 256, 256
      %362 = vsyncadd [#allocation5], %s361
      %s363 = sshll.u32 [#allocation12], 4
      %s364 = int_to_ptr.vmem [resolvable:$true] %s363
      %369 = dma.vmem_to_hbm [thread:$0]  %s364, 256, %s5, [#allocation5], 128, 128, 8
    $region53: #{tpu_custom_call.1} parent=1 // pred_fallthru
      _
    // Predicated region
    $region54: #{tpu_custom_call.1} parent=1 // pred_check
      _
    $region55: #{tpu_custom_call.1} parent=1 // pred_check_branch
      %371 = sbr.rel (0) target = $region57
    $region56: #{tpu_custom_call.1} parent=1 // pred_region
      %372 = dma.done [#allocation5], 256
    $region57: #{tpu_custom_call.1} parent=1 // pred_fallthru
      _
    %373 = vsyncpa [#allocation4], 1
    %374 = vsyncpa [#allocation7], 1
    %375 = vsyncpa [#allocation10], 1
    %376 = vsyncpa [#allocation5], 1

</llo_original>
